<compile_context>
chip_gen: v6e
topology: v6e:2x2x1
jax: 0.10.0
libtpu: 0.0.40
codegen_flags: <defaults>
</compile_context>

<pallas_src>
import functools
import math

import jax
import jax.numpy as jnp
from jax import lax
from jax.experimental import pallas as pl
from jax.experimental.pallas import tpu as pltpu


# ----------------------------------------------------------------------------
# cv2.getStructuringElement(cv2.MORPH_ELLIPSE, (k, k)) replicated in pure Python
# ----------------------------------------------------------------------------
def _ellipse_kernel(ksize: int):
    r = ksize // 2
    c = ksize // 2
    inv_r2 = 1.0 / (r * r) if r else 0.0
    kern = []
    for i in range(ksize):
        row = [0] * ksize
        dy = i - r
        if abs(dy) <= r:
            dx = int(round(c * math.sqrt((r * r - dy * dy) * inv_r2))) if r else 0
            j1 = max(c - dx, 0)
            j2 = min(c + dx + 1, ksize)
            for j in range(j1, j2):
                row[j] = 1
        kern.append(row)
    return kern


def _se_offsets(ksize: int):
    """(dy, dx) offsets (relative to center) where the elliptic SE is 1 (reference)."""
    kern = _ellipse_kernel(ksize)
    r = ksize // 2
    return tuple((i - r, j - r) for i in range(ksize) for j in range(ksize) if kern[i][j])


def _row_halfwidths(ksize: int):
    """Per-row horizontal half-width of the elliptic SE (rows are symmetric runs).
    Index i corresponds to dy = i - ksize//2. None => empty row."""
    kern = _ellipse_kernel(ksize)
    r = ksize // 2
    out = []
    for i in range(ksize):
        cols = [j for j, v in enumerate(kern[i]) if v]
        out.append(max(abs(j - r) for j in cols) if cols else None)
    return tuple(out)


def _xlogx(v: float) -> float:
    return float(v) * math.log(v) if v > 0.0 else 0.0


_VMEM_FALLBACK_USED = False  # perf-only flag: True if get_tpu_info() was unavailable


def _vmem_capacity_bytes() -> int:
    """Per-core VMEM capacity (v5e/v6e: 128 MiB, v7x: 64 MiB).
    Tries several TpuInfo attribute names; falls back to a v7x-safe 64 MiB."""
    global _VMEM_FALLBACK_USED
    try:
        info = pltpu.get_tpu_info()
        for attr in ("vmem_capacity_bytes", "vmem_size_bytes", "vmem_bytes"):
            v = getattr(info, attr, None)
            if v:
                return int(v)
    except Exception:
        pass
    _VMEM_FALLBACK_USED = True
    return 64 * 1024 * 1024


def _pick_tile_h(H: int, C: int, W: int, r: int, pred_bytes: int,
                 budget_bytes: int, batch: int) -> int:
    """Largest H-divisor tile (multiple of 8, or full H) whose per-step VMEM footprint
    fits `budget_bytes`; prefers an even total grid-step count (v7x megacore)."""
    Wp = W + 2 * r

    def step_bytes(th):
        halo = ((th + 2 * r + 7) // 8) * 8
        pred_buf = 2 * pred_bytes * C * th * W           # double-buffered input block
        f32_planes = 3 * 4 * C * th * W                  # logits, logp, one product temp
        i8_planes = 4 * C * halo * Wp                    # one-hot + dilation working set
        small = 2 * 4 * halo * Wp + 2 * 4 * th * W + 2 * 4 * 8 * 128
        return pred_buf + f32_planes + i8_planes + small

    divisors = [d for d in range(8, H, 8) if H % d == 0] + [H]
    fitting = [d for d in divisors if step_bytes(d) <= budget_bytes]
    if not fitting:
        fitting = [min(divisors)]        # best effort; may exceed the soft budget
    best = max(fitting)
    # Prefer an even number of total grid steps (2 TensorCores on v7x) when that
    # does not shrink the tile by more than 2x.
    if (batch * (H // best)) % 2 == 1:
        even = [d for d in fitting if (batch * (H // d)) % 2 == 0 and 2 * d >= best]
        if even:
            best = max(even)
    return best


# ----------------------------------------------------------------------------
# Pallas kernel: one (batch, H-tile) step.
# ----------------------------------------------------------------------------
def _smooth_kl_kernel(pred_ref, lab_ref, tgt_ref, out_ref, *,
                      num_classes, tile_h, W, radius, halfwidths,
                      alpha, a_log_a, ignore_index, work_dtype):
    r = radius
    halo_pad, Wp = lab_ref.shape                                  # W-padded label halo tile

    # ---- haloed, W-padded one-hot (packed work_dtype; pad label -1 -> all zero) -----
    lab = lab_ref[...]                                            # (halo_pad, Wp) int32
    cls_idx = lax.broadcasted_iota(jnp.int32, (num_classes, halo_pad, Wp), 0)
    onehot_p = (lab[None, :, :] == cls_idx).astype(work_dtype)    # (C, halo_pad, Wp)

    # ---- run-decomposed elliptic dilation --------------------------------------------
    # Horizontal: for each distinct per-row half-width of the SE, a running max over
    # static lane-offset slices of the W-padded one-hot (no masks / rolls needed).
    distinct = sorted({hw for hw in halfwidths if hw is not None})
    oh_w = onehot_p[:, :, r:r + W]                                # dx = 0, all halo rows
    wdil = {}
    acc, cur_w = oh_w, 0
    for hw in distinct:
        while cur_w < hw:
            cur_w += 1
            acc = jnp.maximum(
                acc, jnp.maximum(onehot_p[:, :, r - cur_w:r - cur_w + W],
                                 onehot_p[:, :, r + cur_w:r + cur_w + W]))
        wdil[hw] = acc

    # Vertical: halo rows make every dy shift a plain static row slice.
    onehot_center = oh_w[:, r:r + tile_h, :]                      # (C, tile_h, W)
    dil_center = None
    for i, hw in enumerate(halfwidths):                           # i = dy + radius
        if hw is None:
            continue
        src = wdil[hw][:, i:i + tile_h, :]
        dil_center = src if dil_center is None else jnp.maximum(dil_center, src)
    if dil_center is None:                                        # degenerate (empty) SE
        dil_center = onehot_center

    # ---- log_softmax over the channel axis (f32 math, pred kept in native dtype) -----
    logits = pred_ref[...].astype(jnp.float32)                    # (C, tile_h, W)
    m = jnp.max(logits, axis=0, keepdims=True)
    z = logits - m
    logp = z - jnp.log(jnp.sum(jnp.exp(z), axis=0, keepdims=True))

    # ---- KL-divergence tile partial sum (soft_target never materialized) -------------
    # sum(xlogy(soft, soft)) = a*log(a)*(sum(dilated) - n_pix) + (1-a)*log(1-a)*n_pix;
    # the n_pix constants are added in the wrapper, so the kernel only needs
    #   a*log(a)*sum(dilated) - sum(valid * (a*sum_c(dil*logp) + (1-2a)*sum_c(oh*logp))).
    dil_f = dil_center.astype(jnp.float32)
    oh_f = onehot_center.astype(jnp.float32)
    cross_dil = jnp.sum(dil_f * logp, axis=0)                     # (tile_h, W)
    cross_oh = jnp.sum(oh_f * logp, axis=0)                       # (tile_h, W)
    dil_pp = jnp.sum(dil_f, axis=0)                               # (tile_h, W)

    valid = (tgt_ref[...] != ignore_index).astype(jnp.float32)    # (tile_h, W)
    cross_pp = alpha * cross_dil + (1.0 - 2.0 * alpha) * cross_oh
    partial = jnp.sum(a_log_a * dil_pp - cross_pp * valid)        # scalar

    # Lane-dense per-tile output block (summed to a scalar in the wrapper).
    out_ref[...] = jnp.broadcast_to(partial, (1, 1, 8, 128))


# ----------------------------------------------------------------------------
# Wrapper
# ----------------------------------------------------------------------------
def smooth_kl_divergence(pred, target, *, kernel_size=5, alpha=0.1,
                         loss_weight=1.0, ignore_index=255, reduction='mean',
                         tile_h=None):
    """pred: (N, C, H, W) float logits (f32 or bf16); target: (N, H, W) integer labels."""
    N, C, H, W = pred.shape
    r = kernel_size // 2
    halfwidths = _row_halfwidths(kernel_size)
    pred_bytes = jnp.dtype(pred.dtype).itemsize

    vmem_cap = _vmem_capacity_bytes()
    vmem_limit = int(vmem_cap * 0.9)
    if tile_h is None:
        tile_h = _pick_tile_h(H, C, W, r, pred_bytes, int(vmem_limit * 0.7), N)
    assert H % tile_h == 0 and (tile_h % 8 == 0 or tile_h == H), (H, tile_h)
    n_tiles = H // tile_h
    halo_pad = ((tile_h + 2 * r + 7) // 8) * 8
    Wp = W + 2 * r

    # Clamped labels regrouped into per-tile halo blocks, -1 padded in H and W.
    target_i32 = target.astype(jnp.int32)
    clamped = jnp.clip(target_i32, 0, C - 1)
    pad_bottom = halo_pad - tile_h - r                            # >= r by construction
    lab_pad = jnp.pad(clamped, ((0, 0), (r, pad_bottom), (r, r)), constant_values=-1)
    row_idx = jnp.arange(n_tiles)[:, None] * tile_h + jnp.arange(halo_pad)[None, :]
    lab_tiles = jnp.take(lab_pad, row_idx, axis=1)                # (N, n_tiles, halo_pad, Wp)

    a_log_a = _xlogx(alpha)
    b_log_b = _xlogx(1.0 - alpha)

    def _call(work_dtype):
        kernel = functools.partial(
            _smooth_kl_kernel, num_classes=C, tile_h=tile_h, W=W, radius=r,
            halfwidths=halfwidths, alpha=float(alpha), a_log_a=a_log_a,
            ignore_index=int(ignore_index), work_dtype=work_dtype)
        return pl.pallas_call(
            kernel,
            out_shape=jax.ShapeDtypeStruct((N, n_tiles, 8, 128), jnp.float32),
            grid_spec=pltpu.PrefetchScalarGridSpec(
                num_scalar_prefetch=0,
                grid=(N, n_tiles),
                in_specs=[
                    # pred tile (leading batch dim squeezed out of the kernel ref)
                    pl.BlockSpec((None, C, tile_h, W), lambda n, t: (n, 0, t, 0)),
                    # per-tile label halo block (8-aligned rows, W padded by r each side)
                    pl.BlockSpec((None, None, halo_pad, Wp), lambda n, t: (n, t, 0, 0)),
                    # raw labels (valid-mask source) for the center rows only
                    pl.BlockSpec((None, tile_h, W), lambda n, t: (n, t, 0)),
                ],
                out_specs=pl.BlockSpec((1, 1, 8, 128), lambda n, t: (n, t, 0, 0)),
            ),
            compiler_params=pltpu.CompilerParams(
                dimension_semantics=("parallel", "parallel"),
                vmem_limit_bytes=vmem_limit),
        )(pred, lab_tiles, target_i32)

    try:
        partials = _call(jnp.int8)          # packed dilation: 4 elems / 32-bit lane word
    except Exception:
        # TODO(synk): drop this fallback once packed int8 sublane-offset relayouts are
        # guaranteed on all toolchains; f32 keeps correctness, loses the packing win.
        partials = _call(jnp.float32)

    total = jnp.sum(partials[:, :, 0, 0])
    # Constant part of the closed-form xlogy term (per-pixel counts are known).
    total = total + float(N * H * W) * (b_log_b - a_log_a)

    if reduction == 'mean':
        loss = total / float(N * C * H * W)
    elif reduction == 'sum':
        loss = total
    else:
        # TODO(synk): reduction='none' needs an elementwise (N,C,H,W) output variant.
        raise NotImplementedError(reduction)
    return loss_weight * loss


# ----------------------------------------------------------------------------
# Pure-JAX reference (same math) used for a correctness check.
# ----------------------------------------------------------------------------
def _reference(pred, target, kernel_size, alpha, loss_weight, ignore_index):
    N, C, H, W = pred.shape
    logp = jax.nn.log_softmax(pred.astype(jnp.float32), axis=1)
    valid = (target != ignore_index).astype(jnp.float32)
    onehot = jax.nn.one_hot(jnp.clip(target, 0, C - 1), C, dtype=jnp.float32)
    onehot = jnp.transpose(onehot, (0, 3, 1, 2))                  # (N, C, H, W)
    r = kernel_size // 2
    padded = jnp.pad(onehot, ((0, 0), (0, 0), (r, r), (r, r)))
    dilated = onehot
    for (dy, dx) in _se_offsets(kernel_size):
        dilated = jnp.maximum(dilated, padded[:, :, r + dy:r + dy + H, r + dx:r + dx + W])
    soft = (dilated - onehot) * alpha + onehot * (1.0 - alpha)
    inp = logp * valid[:, None, :, :]
    kld = jnp.where(soft > 0.0, soft * jnp.log(soft), 0.0) - soft * inp
    return loss_weight * jnp.mean(kld)


if __name__ == "__main__":
    key = jax.random.PRNGKey(0)
    k1, k2, k3 = jax.random.split(key, 3)

    N, C, H, W = 2, 4, 16, 16
    pred = jax.random.normal(k1, (N, C, H, W), dtype=jnp.float32)
    target = jax.random.randint(k2, (N, H, W), 0, C).astype(jnp.int32)
    # sprinkle some ignore_index pixels to exercise the valid mask
    ignore = jax.random.uniform(k3, (N, H, W)) < 0.1
    target = jnp.where(ignore, jnp.int32(255), target)

    ref = _reference(pred, target, kernel_size=5, alpha=0.1,
                     loss_weight=1.0, ignore_index=255)

    # Explicitly tiled path (2 H-tiles; exercises the cross-tile halo).
    loss_tiled = smooth_kl_divergence(pred, target, kernel_size=5, alpha=0.1,
                                      loss_weight=1.0, ignore_index=255,
                                      reduction='mean', tile_h=8)
    loss_tiled = jax.block_until_ready(loss_tiled)
    assert jnp.allclose(loss_tiled, ref, rtol=1e-4, atol=1e-6), (float(loss_tiled), float(ref))

    # Auto tile selection (full-height tile at this small size).
    loss_auto = smooth_kl_divergence(pred, target, kernel_size=5, alpha=0.1,
                                     loss_weight=1.0, ignore_index=255,
                                     reduction='mean')
    loss_auto = jax.block_until_ready(loss_auto)
    assert jnp.allclose(loss_auto, ref, rtol=1e-4, atol=1e-6), (float(loss_auto), float(ref))

    print("KERNEL_OK")
</pallas_src>

<mosaic_0001>
module attributes {stable_mosaic.version = 11 : i64} {
  func.func @_smooth_kl_kernel(%arg0: i32, %arg1: i32, %arg2: memref<1x4x8x16xf32, #tpu.memory_space<vmem>>, %arg3: memref<1x1x16x20xi32, #tpu.memory_space<vmem>>, %arg4: memref<1x8x16xi32, #tpu.memory_space<vmem>>, %arg5: memref<1x1x8x128xf32, #tpu.memory_space<vmem>>) attributes {dimension_semantics = [#tpu.dimension_semantics<parallel>, #tpu.dimension_semantics<parallel>], iteration_bounds = array<i64: 2, 2>, scalar_prefetch = 0 : i64, scratch_operands = 0 : i64, tpu.core_type = #tpu.core_type<tc>, window_params = [{transform_indices = @transform_0, window_bounds = array<i64: 1, 4, 8, 16>}, {transform_indices = @transform_1, window_bounds = array<i64: 1, 1, 16, 20>}, {transform_indices = @transform_2, window_bounds = array<i64: 1, 8, 16>}, {transform_indices = @transform_3, window_bounds = array<i64: 1, 1, 8, 128>}]} {
    %c0 = arith.constant 0 : index
    %c0_0 = arith.constant 0 : index
    %c0_1 = arith.constant 0 : index
    %c0_2 = arith.constant 0 : index
    %0 = vector.load %arg3[%c0, %c0_0, %c0_1, %c0_2] : memref<1x1x16x20xi32, #tpu.memory_space<vmem>>, vector<1x1x16x20xi32>
    %1 = vector.shape_cast %0 : vector<1x1x16x20xi32> to vector<16x20xi32>
    %2 = tpu.iota {dimensions = array<i32: 0>} : vector<4x16x20xi32>
    %3 = vector.shape_cast %1 : vector<16x20xi32> to vector<1x16x20xi32>
    %4 = vector.broadcast %3 : vector<1x16x20xi32> to vector<4x16x20xi32>
    %5 = arith.cmpi eq, %4, %2 : vector<4x16x20xi32>
    %6 = arith.extui %5 : vector<4x16x20xi1> to vector<4x16x20xi8>
    %7 = vector.extract_strided_slice %6 {offsets = [0, 0, 2], sizes = [4, 16, 16], strides = [1, 1, 1]} : vector<4x16x20xi8> to vector<4x16x16xi8>
    %8 = vector.extract_strided_slice %6 {offsets = [0, 0, 1], sizes = [4, 16, 16], strides = [1, 1, 1]} : vector<4x16x20xi8> to vector<4x16x16xi8>
    %9 = vector.extract_strided_slice %6 {offsets = [0, 0, 3], sizes = [4, 16, 16], strides = [1, 1, 1]} : vector<4x16x20xi8> to vector<4x16x16xi8>
    %10 = arith.maxsi %8, %9 : vector<4x16x16xi8>
    %11 = arith.maxsi %7, %10 : vector<4x16x16xi8>
    %12 = vector.extract_strided_slice %6 {offsets = [0, 0, 0], sizes = [4, 16, 16], strides = [1, 1, 1]} : vector<4x16x20xi8> to vector<4x16x16xi8>
    %13 = vector.extract_strided_slice %6 {offsets = [0, 0, 4], sizes = [4, 16, 16], strides = [1, 1, 1]} : vector<4x16x20xi8> to vector<4x16x16xi8>
    %14 = arith.maxsi %12, %13 : vector<4x16x16xi8>
    %15 = arith.maxsi %11, %14 : vector<4x16x16xi8>
    %16 = vector.extract_strided_slice %7 {offsets = [0, 2, 0], sizes = [4, 8, 16], strides = [1, 1, 1]} : vector<4x16x16xi8> to vector<4x8x16xi8>
    %17 = vector.extract_strided_slice %7 {offsets = [0, 0, 0], sizes = [4, 8, 16], strides = [1, 1, 1]} : vector<4x16x16xi8> to vector<4x8x16xi8>
    %18 = vector.extract_strided_slice %15 {offsets = [0, 1, 0], sizes = [4, 8, 16], strides = [1, 1, 1]} : vector<4x16x16xi8> to vector<4x8x16xi8>
    %19 = arith.maxsi %17, %18 : vector<4x8x16xi8>
    %20 = vector.extract_strided_slice %15 {offsets = [0, 2, 0], sizes = [4, 8, 16], strides = [1, 1, 1]} : vector<4x16x16xi8> to vector<4x8x16xi8>
    %21 = arith.maxsi %19, %20 : vector<4x8x16xi8>
    %22 = vector.extract_strided_slice %15 {offsets = [0, 3, 0], sizes = [4, 8, 16], strides = [1, 1, 1]} : vector<4x16x16xi8> to vector<4x8x16xi8>
    %23 = arith.maxsi %21, %22 : vector<4x8x16xi8>
    %24 = vector.extract_strided_slice %7 {offsets = [0, 4, 0], sizes = [4, 8, 16], strides = [1, 1, 1]} : vector<4x16x16xi8> to vector<4x8x16xi8>
    %25 = arith.maxsi %23, %24 : vector<4x8x16xi8>
    %c0_3 = arith.constant 0 : index
    %c0_4 = arith.constant 0 : index
    %c0_5 = arith.constant 0 : index
    %c0_6 = arith.constant 0 : index
    %26 = vector.load %arg2[%c0_3, %c0_4, %c0_5, %c0_6] : memref<1x4x8x16xf32, #tpu.memory_space<vmem>>, vector<1x4x8x16xf32>
    %27 = vector.shape_cast %26 : vector<1x4x8x16xf32> to vector<4x8x16xf32>
    %cst = arith.constant dense<0xFF800000> : vector<8x16xf32>
    %28 = vector.multi_reduction <maximumf>, %27, %cst [0] : vector<4x8x16xf32> to vector<8x16xf32>
    %29 = vector.shape_cast %28 : vector<8x16xf32> to vector<1x8x16xf32>
    %30 = vector.broadcast %29 : vector<1x8x16xf32> to vector<4x8x16xf32>
    %31 = arith.subf %27, %30 : vector<4x8x16xf32>
    %32 = math.exp %31 : vector<4x8x16xf32>
    %cst_7 = arith.constant dense<0.000000e+00> : vector<8x16xf32>
    %33 = vector.multi_reduction <add>, %32, %cst_7 [0] : vector<4x8x16xf32> to vector<8x16xf32>
    %34 = vector.shape_cast %33 : vector<8x16xf32> to vector<1x8x16xf32>
    %35 = math.log %34 : vector<1x8x16xf32>
    %36 = vector.broadcast %35 : vector<1x8x16xf32> to vector<4x8x16xf32>
    %37 = arith.subf %31, %36 : vector<4x8x16xf32>
    %38 = arith.sitofp %25 : vector<4x8x16xi8> to vector<4x8x16xf32>
    %39 = arith.sitofp %16 : vector<4x8x16xi8> to vector<4x8x16xf32>
    %40 = arith.mulf %38, %37 : vector<4x8x16xf32>
    %cst_8 = arith.constant dense<0.000000e+00> : vector<8x16xf32>
    %41 = vector.multi_reduction <add>, %40, %cst_8 [0] : vector<4x8x16xf32> to vector<8x16xf32>
    %42 = arith.mulf %39, %37 : vector<4x8x16xf32>
    %cst_9 = arith.constant dense<0.000000e+00> : vector<8x16xf32>
    %43 = vector.multi_reduction <add>, %42, %cst_9 [0] : vector<4x8x16xf32> to vector<8x16xf32>
    %cst_10 = arith.constant dense<0.000000e+00> : vector<8x16xf32>
    %44 = vector.multi_reduction <add>, %38, %cst_10 [0] : vector<4x8x16xf32> to vector<8x16xf32>
    %c0_11 = arith.constant 0 : index
    %c0_12 = arith.constant 0 : index
    %c0_13 = arith.constant 0 : index
    %45 = vector.load %arg4[%c0_11, %c0_12, %c0_13] : memref<1x8x16xi32, #tpu.memory_space<vmem>>, vector<1x8x16xi32>
    %46 = vector.shape_cast %45 : vector<1x8x16xi32> to vector<8x16xi32>
    %c255_i32 = arith.constant 255 : i32
    %47 = vector.broadcast %c255_i32 : i32 to vector<8x16xi32>
    %48 = arith.cmpi ne, %46, %47 : vector<8x16xi32>
    %49 = arith.extui %48 : vector<8x16xi1> to vector<8x16xi32>
    %50 = arith.sitofp %49 : vector<8x16xi32> to vector<8x16xf32>
    %cst_14 = arith.constant 1.000000e-01 : f32
    %51 = vector.broadcast %cst_14 : f32 to vector<8x16xf32>
    %52 = arith.mulf %51, %41 : vector<8x16xf32>
    %cst_15 = arith.constant 8.000000e-01 : f32
    %53 = vector.broadcast %cst_15 : f32 to vector<8x16xf32>
    %54 = arith.mulf %53, %43 : vector<8x16xf32>
    %55 = arith.addf %52, %54 : vector<8x16xf32>
    %cst_16 = arith.constant -0.23025851 : f32
    %56 = vector.broadcast %cst_16 : f32 to vector<8x16xf32>
    %57 = arith.mulf %56, %44 : vector<8x16xf32>
    %58 = arith.mulf %55, %50 : vector<8x16xf32>
    %59 = arith.subf %57, %58 : vector<8x16xf32>
    %60 = vector.shape_cast %59 : vector<8x16xf32> to vector<1x8x16xf32>
    %cst_17 = arith.constant dense<0.000000e+00> : vector<1xf32>
    %61 = vector.multi_reduction <add>, %60, %cst_17 [1, 2] : vector<1x8x16xf32> to vector<1xf32>
    %62 = vector.shape_cast %61 : vector<1xf32> to vector<1x1x1xf32>
    %63 = vector.extract %62[0, 0, 0] : f32 from vector<1x1x1xf32>
    %64 = vector.broadcast %63 : f32 to vector<1x1x8x128xf32>
    %c0_18 = arith.constant 0 : index
    %c0_19 = arith.constant 0 : index
    %c0_20 = arith.constant 0 : index
    %c0_21 = arith.constant 0 : index
    %65 = vector.load %arg5[%c0_18, %c0_19, %c0_20, %c0_21] : memref<1x1x8x128xf32, #tpu.memory_space<vmem>>, vector<1x1x8x128xf32>
    tpu.vector_store %arg5[%c0_18, %c0_19, %c0_20, %c0_21], %64 {strides = array<i32>} : memref<1x1x8x128xf32, #tpu.memory_space<vmem>>, vector<1x1x8x128xf32>,
    return
  }
  func.func @transform_0(%arg0: i32, %arg1: i32) -> (i32, i32, i32, i32) {
    %c0_i32 = arith.constant 0 : i32
    %c0_i32_0 = arith.constant 0 : i32
    %c0_i32_1 = arith.constant 0 : i32
    return %arg0, %c0_i32, %arg1, %c0_i32_0 : i32, i32, i32, i32
  }
  func.func @transform_1(%arg0: i32, %arg1: i32) -> (i32, i32, i32, i32) {
    %c0_i32 = arith.constant 0 : i32
    %c0_i32_0 = arith.constant 0 : i32
    %c0_i32_1 = arith.constant 0 : i32
    return %arg0, %arg1, %c0_i32, %c0_i32_0 : i32, i32, i32, i32
  }
  func.func @transform_2(%arg0: i32, %arg1: i32) -> (i32, i32, i32) {
    %c0_i32 = arith.constant 0 : i32
    %c0_i32_0 = arith.constant 0 : i32
    return %arg0, %arg1, %c0_i32 : i32, i32, i32
  }
  func.func @transform_3(%arg0: i32, %arg1: i32) -> (i32, i32, i32, i32) {
    %c0_i32 = arith.constant 0 : i32
    %c0_i32_0 = arith.constant 0 : i32
    %c0_i32_1 = arith.constant 0 : i32
    return %arg0, %arg1, %c0_i32, %c0_i32_0 : i32, i32, i32, i32
  }
}

module attributes {stable_mosaic.version = 11 : i64} {
  func.func @_smooth_kl_kernel(%arg0: i32, %arg1: i32, %arg2: memref<1x4x8x16xf32, #tpu.memory_space<vmem>>, %arg3: memref<1x1x16x20xi32, #tpu.memory_space<vmem>>, %arg4: memref<1x8x16xi32, #tpu.memory_space<vmem>>, %arg5: memref<1x1x8x128xf32, #tpu.memory_space<vmem>>) attributes {dimension_semantics = [#tpu.dimension_semantics<parallel>, #tpu.dimension_semantics<parallel>], iteration_bounds = array<i64: 2, 2>, scalar_prefetch = 0 : i64, scratch_operands = 0 : i64, tpu.core_type = #tpu.core_type<tc>, window_params = [{transform_indices = @transform_0, window_bounds = array<i64: 1, 4, 8, 16>}, {transform_indices = @transform_1, window_bounds = array<i64: 1, 1, 16, 20>}, {transform_indices = @transform_2, window_bounds = array<i64: 1, 8, 16>}, {transform_indices = @transform_3, window_bounds = array<i64: 1, 1, 8, 128>}]} {
    %c0 = arith.constant 0 : index
    %c0_0 = arith.constant 0 : index
    %c0_1 = arith.constant 0 : index
    %c0_2 = arith.constant 0 : index
    %0 = vector.load %arg3[%c0, %c0_0, %c0_1, %c0_2] : memref<1x1x16x20xi32, #tpu.memory_space<vmem>>, vector<1x1x16x20xi32>
    %1 = vector.shape_cast %0 : vector<1x1x16x20xi32> to vector<16x20xi32>
    %2 = tpu.iota {dimensions = array<i32: 0>} : vector<4x16x20xi32>
    %3 = vector.shape_cast %1 : vector<16x20xi32> to vector<1x16x20xi32>
    %4 = vector.broadcast %3 : vector<1x16x20xi32> to vector<4x16x20xi32>
    %5 = arith.cmpi eq, %4, %2 : vector<4x16x20xi32>
    %6 = arith.extui %5 : vector<4x16x20xi1> to vector<4x16x20xi32>
    %7 = arith.sitofp %6 : vector<4x16x20xi32> to vector<4x16x20xf32>
    %8 = vector.extract_strided_slice %7 {offsets = [0, 0, 2], sizes = [4, 16, 16], strides = [1, 1, 1]} : vector<4x16x20xf32> to vector<4x16x16xf32>
    %9 = vector.extract_strided_slice %7 {offsets = [0, 0, 1], sizes = [4, 16, 16], strides = [1, 1, 1]} : vector<4x16x20xf32> to vector<4x16x16xf32>
    %10 = vector.extract_strided_slice %7 {offsets = [0, 0, 3], sizes = [4, 16, 16], strides = [1, 1, 1]} : vector<4x16x20xf32> to vector<4x16x16xf32>
    %11 = arith.maximumf %9, %10 : vector<4x16x16xf32>
    %12 = arith.maximumf %8, %11 : vector<4x16x16xf32>
    %13 = vector.extract_strided_slice %7 {offsets = [0, 0, 0], sizes = [4, 16, 16], strides = [1, 1, 1]} : vector<4x16x20xf32> to vector<4x16x16xf32>
    %14 = vector.extract_strided_slice %7 {offsets = [0, 0, 4], sizes = [4, 16, 16], strides = [1, 1, 1]} : vector<4x16x20xf32> to vector<4x16x16xf32>
    %15 = arith.maximumf %13, %14 : vector<4x16x16xf32>
    %16 = arith.maximumf %12, %15 : vector<4x16x16xf32>
    %17 = vector.extract_strided_slice %8 {offsets = [0, 2, 0], sizes = [4, 8, 16], strides = [1, 1, 1]} : vector<4x16x16xf32> to vector<4x8x16xf32>
    %18 = vector.extract_strided_slice %8 {offsets = [0, 0, 0], sizes = [4, 8, 16], strides = [1, 1, 1]} : vector<4x16x16xf32> to vector<4x8x16xf32>
    %19 = vector.extract_strided_slice %16 {offsets = [0, 1, 0], sizes = [4, 8, 16], strides = [1, 1, 1]} : vector<4x16x16xf32> to vector<4x8x16xf32>
    %20 = arith.maximumf %18, %19 : vector<4x8x16xf32>
    %21 = vector.extract_strided_slice %16 {offsets = [0, 2, 0], sizes = [4, 8, 16], strides = [1, 1, 1]} : vector<4x16x16xf32> to vector<4x8x16xf32>
    %22 = arith.maximumf %20, %21 : vector<4x8x16xf32>
    %23 = vector.extract_strided_slice %16 {offsets = [0, 3, 0], sizes = [4, 8, 16], strides = [1, 1, 1]} : vector<4x16x16xf32> to vector<4x8x16xf32>
    %24 = arith.maximumf %22, %23 : vector<4x8x16xf32>
    %25 = vector.extract_strided_slice %8 {offsets = [0, 4, 0], sizes = [4, 8, 16], strides = [1, 1, 1]} : vector<4x16x16xf32> to vector<4x8x16xf32>
    %26 = arith.maximumf %24, %25 : vector<4x8x16xf32>
    %c0_3 = arith.constant 0 : index
    %c0_4 = arith.constant 0 : index
    %c0_5 = arith.constant 0 : index
    %c0_6 = arith.constant 0 : index
    %27 = vector.load %arg2[%c0_3, %c0_4, %c0_5, %c0_6] : memref<1x4x8x16xf32, #tpu.memory_space<vmem>>, vector<1x4x8x16xf32>
    %28 = vector.shape_cast %27 : vector<1x4x8x16xf32> to vector<4x8x16xf32>
    %cst = arith.constant dense<0xFF800000> : vector<8x16xf32>
    %29 = vector.multi_reduction <maximumf>, %28, %cst [0] : vector<4x8x16xf32> to vector<8x16xf32>
    %30 = vector.shape_cast %29 : vector<8x16xf32> to vector<1x8x16xf32>
    %31 = vector.broadcast %30 : vector<1x8x16xf32> to vector<4x8x16xf32>
    %32 = arith.subf %28, %31 : vector<4x8x16xf32>
    %33 = math.exp %32 : vector<4x8x16xf32>
    %cst_7 = arith.constant dense<0.000000e+00> : vector<8x16xf32>
    %34 = vector.multi_reduction <add>, %33, %cst_7 [0] : vector<4x8x16xf32> to vector<8x16xf32>
    %35 = vector.shape_cast %34 : vector<8x16xf32> to vector<1x8x16xf32>
    %36 = math.log %35 : vector<1x8x16xf32>
    %37 = vector.broadcast %36 : vector<1x8x16xf32> to vector<4x8x16xf32>
    %38 = arith.subf %32, %37 : vector<4x8x16xf32>
    %39 = arith.mulf %26, %38 : vector<4x8x16xf32>
    %cst_8 = arith.constant dense<0.000000e+00> : vector<8x16xf32>
    %40 = vector.multi_reduction <add>, %39, %cst_8 [0] : vector<4x8x16xf32> to vector<8x16xf32>
    %41 = arith.mulf %17, %38 : vector<4x8x16xf32>
    %cst_9 = arith.constant dense<0.000000e+00> : vector<8x16xf32>
    %42 = vector.multi_reduction <add>, %41, %cst_9 [0] : vector<4x8x16xf32> to vector<8x16xf32>
    %cst_10 = arith.constant dense<0.000000e+00> : vector<8x16xf32>
    %43 = vector.multi_reduction <add>, %26, %cst_10 [0] : vector<4x8x16xf32> to vector<8x16xf32>
    %c0_11 = arith.constant 0 : index
    %c0_12 = arith.constant 0 : index
    %c0_13 = arith.constant 0 : index
    %44 = vector.load %arg4[%c0_11, %c0_12, %c0_13] : memref<1x8x16xi32, #tpu.memory_space<vmem>>, vector<1x8x16xi32>
    %45 = vector.shape_cast %44 : vector<1x8x16xi32> to vector<8x16xi32>
    %c255_i32 = arith.constant 255 : i32
    %46 = vector.broadcast %c255_i32 : i32 to vector<8x16xi32>
    %47 = arith.cmpi ne, %45, %46 : vector<8x16xi32>
    %48 = arith.extui %47 : vector<8x16xi1> to vector<8x16xi32>
    %49 = arith.sitofp %48 : vector<8x16xi32> to vector<8x16xf32>
    %cst_14 = arith.constant 1.000000e-01 : f32
    %50 = vector.broadcast %cst_14 : f32 to vector<8x16xf32>
    %51 = arith.mulf %50, %40 : vector<8x16xf32>
    %cst_15 = arith.constant 8.000000e-01 : f32
    %52 = vector.broadcast %cst_15 : f32 to vector<8x16xf32>
    %53 = arith.mulf %52, %42 : vector<8x16xf32>
    %54 = arith.addf %51, %53 : vector<8x16xf32>
    %cst_16 = arith.constant -0.23025851 : f32
    %55 = vector.broadcast %cst_16 : f32 to vector<8x16xf32>
    %56 = arith.mulf %55, %43 : vector<8x16xf32>
    %57 = arith.mulf %54, %49 : vector<8x16xf32>
    %58 = arith.subf %56, %57 : vector<8x16xf32>
    %59 = vector.shape_cast %58 : vector<8x16xf32> to vector<1x8x16xf32>
    %cst_17 = arith.constant dense<0.000000e+00> : vector<1xf32>
    %60 = vector.multi_reduction <add>, %59, %cst_17 [1, 2] : vector<1x8x16xf32> to vector<1xf32>
    %61 = vector.shape_cast %60 : vector<1xf32> to vector<1x1x1xf32>
    %62 = vector.extract %61[0, 0, 0] : f32 from vector<1x1x1xf32>
    %63 = vector.broadcast %62 : f32 to vector<1x1x8x128xf32>
    %c0_18 = arith.constant 0 : index
    %c0_19 = arith.constant 0 : index
    %c0_20 = arith.constant 0 : index
    %c0_21 = arith.constant 0 : index
    %64 = vector.load %arg5[%c0_18, %c0_19, %c0_20, %c0_21] : memref<1x1x8x128xf32, #tpu.memory_space<vmem>>, vector<1x1x8x128xf32>
    tpu.vector_store %arg5[%c0_18, %c0_19, %c0_20, %c0_21], %63 {strides = array<i32>} : memref<1x1x8x128xf32, #tpu.memory_space<vmem>>, vector<1x1x8x128xf32>,
    return
  }
  func.func @transform_0(%arg0: i32, %arg1: i32) -> (i32, i32, i32, i32) {
    %c0_i32 = arith.constant 0 : i32
    %c0_i32_0 = arith.constant 0 : i32
    %c0_i32_1 = arith.constant 0 : i32
    return %arg0, %c0_i32, %arg1, %c0_i32_0 : i32, i32, i32, i32
  }
  func.func @transform_1(%arg0: i32, %arg1: i32) -> (i32, i32, i32, i32) {
    %c0_i32 = arith.constant 0 : i32
    %c0_i32_0 = arith.constant 0 : i32
    %c0_i32_1 = arith.constant 0 : i32
    return %arg0, %arg1, %c0_i32, %c0_i32_0 : i32, i32, i32, i32
  }
  func.func @transform_2(%arg0: i32, %arg1: i32) -> (i32, i32, i32) {
    %c0_i32 = arith.constant 0 : i32
    %c0_i32_0 = arith.constant 0 : i32
    return %arg0, %arg1, %c0_i32 : i32, i32, i32
  }
  func.func @transform_3(%arg0: i32, %arg1: i32) -> (i32, i32, i32, i32) {
    %c0_i32 = arith.constant 0 : i32
    %c0_i32_0 = arith.constant 0 : i32
    %c0_i32_1 = arith.constant 0 : i32
    return %arg0, %arg1, %c0_i32, %c0_i32_0 : i32, i32, i32, i32
  }
}

</mosaic_0001>

<llo_original>
// kernel: tpu_custom_call.1
$region0: #{tpu_custom_call.1}
  #allocation0 [shape = 'u32[]', space=smem, size = 0x4, offset = 0x4, fixed_abs, tag = 'smem constant byte address 0x4 - core index']
  #allocation1 [shape = 'u32[144,128]{1,0:T(1,128)}', space=vmem, size = 0x12000, scoped, tag = 'internal scratch']
  %s0 = inlined_call_operand.hbm [shape: f32[2,4,16,16], index: 0, kind: input, shape index: {}]
  %s1 = inlined_call_operand.hbm [shape: s32[2,2,16,20], index: 1, kind: input, shape index: {}]
  %s2 = inlined_call_operand.hbm [shape: s32[2,16,16], index: 2, kind: input, shape index: {}]
  %s3 = inlined_call_operand.hbm [shape: f32[2,2,8,128], index: 3, kind: output, shape index: {}]
  %s4 = sld [smem:[#allocation0]]
  $region57: #{tpu_custom_call.1} parent=0
    _
  %s6 = ssub.s32 1, %s4
  %s7 = scalar_select 0, %s6, %s4
  $region1: #{tpu_custom_call.1} parent=0
    #allocation2 [shape = 'u8[32768]{0}', space=vmem, size = 0x8000, scoped, tag = 'input window, operand 0']
    #allocation3 [shape = 's32[2]{0}', space=sflag, size = 0x8, scoped, tag = 'scoped memory for tpu_custom_call.1']
    #allocation4 [shape = 's32[2]{0}', space=sflag, size = 0x8, scoped, tag = 'scoped memory for tpu_custom_call.1']
    #allocation5 [shape = 'u8[16384]{0}', space=vmem, size = 0x4000, scoped, tag = 'input window, operand 1']
    #allocation6 [shape = 's32[2]{0}', space=sflag, size = 0x8, scoped, tag = 'scoped memory for tpu_custom_call.1']
    #allocation7 [shape = 'u8[8192]{0}', space=vmem, size = 0x2000, scoped, tag = 'input window, operand 2']
    #allocation8 [shape = 'u8[8192]{0}', space=vmem, size = 0x2000, scoped, tag = 'output window, operand 0']
    %8 = vsyncpa [#allocation3], 0
    %s9 = scalar_lea.sflag [#allocation3], 1
    %10 = vsyncpa %s9, 0
    %11 = vsyncpa [#allocation6], 0
    %s12 = scalar_lea.sflag [#allocation6], 1
    %13 = vsyncpa %s12, 0
    %14 = vsyncpa [#allocation4], 0
    %s15 = scalar_lea.sflag [#allocation4], 1
    %16 = vsyncpa %s15, 0
    loop: start=0, step=1, limit=6
    $region2: #{tpu_custom_call.1} parent=1 // loop_pre_header
      _
    $region3: #{tpu_custom_call.1} parent=1 // loop_header
      %s18 = sphi 0, %s22
      %p19 = scmp.ge.s32.totalorder %s18, 6
      %s25 = sphi 0, %s37
      %s26 = sphi 0, %s33
      %s27 = sphi 0, %s25
      %s28 = sphi 0, %s26
      %s29 = sphi 0, %s27
      %s30 = sphi 0, %s28
      %s42 = sphi 0, %s44
      %s45 = sphi 0, %s42
      %s46 = sphi 0, %s45
      %s62 = sphi 0, %s46
      %s70 = sphi 0, %s72
      %s73 = sphi 0, %s70
      %s74 = sphi 0, %s73
      %s90 = sphi 0, %s74
      %s98 = sphi 0, %s100
      %s101 = sphi 0, %s98
      %s102 = sphi 0, %s101
      %s118 = sphi 0, %s102
      %s126 = sphi 0, %s128
      %s129 = sphi 0, %s126
      %s130 = sphi 0, %s129
      %s146 = sphi 0, %s130
    $region4: #{tpu_custom_call.1} parent=1 // loop_header_branch
      %21 = sbr.rel (%p19) target = $region8
    $region5: #{tpu_custom_call.1} parent=1 // loop_body
      %s23 = ssub.s32 %s18, 1
      %s24 = ssub.s32 %s18, 2
      %s31 = sadd.s32 1, %s26
      %p32 = scmp.ge.s32.totalorder %s31, 2
      %s33 = scalar_select %p32, 0, %s31
      %s34 = sadd.s32 1, %s25
      %s35 = scalar_select %p32, %s34, %s25
      %p36 = scmp.ge.s32.totalorder %s35, 2
      %s37 = scalar_select %p36, 0, %s35
      %s38 = ssub.s32 %s25, %s37
      %s39 = ssub.s32 %s26, %s33
      %s40 = sor.u32 %s38, %s39
      %p41 = scmp.eq.s32.totalorder %s40, 0
      %s43 = sadd.s32 %s42, 1
      %s44 = scalar_select %p41, %s42, %s43
      %p47 = pneg %p41
      %p48 = scmp.eq.s32.totalorder %s18, 3
      %p49 = por %p47, %p48
      %p50 = scmp.ne.s32.totalorder %s42, %s45
      %p51 = scmp.eq.s32.totalorder %s18, 0
      %p52 = por %p50, %p51
      %p53 = scmp.ne.s32.totalorder %s42, %s45
      %p54 = scmp.eq.s32.totalorder %s23, 3
      %p55 = por %p53, %p54
      %p56 = scmp.ne.s32.totalorder %s45, %s46
      %p57 = scmp.eq.s32.totalorder %s23, 0
      %p58 = por %p56, %p57
      %p59 = scmp.ne.s32.totalorder %s45, %s46
      %p60 = scmp.eq.s32.totalorder %s24, 3
      %p61 = por %p59, %p60
      %p63 = scmp.ne.s32.totalorder %s46, %s62
      %p64 = scmp.eq.s32.totalorder %s24, 0
      %p65 = por %p63, %p64
      %s66 = ssub.s32 %s25, %s37
      %s67 = ssub.s32 %s26, %s33
      %s68 = sor.u32 %s66, %s67
      %p69 = scmp.eq.s32.totalorder %s68, 0
      %s71 = sadd.s32 %s70, 1
      %s72 = scalar_select %p69, %s70, %s71
      %p75 = pneg %p69
      %p76 = scmp.eq.s32.totalorder %s18, 3
      %p77 = por %p75, %p76
      %p78 = scmp.ne.s32.totalorder %s70, %s73
      %p79 = scmp.eq.s32.totalorder %s18, 0
      %p80 = por %p78, %p79
      %p81 = scmp.ne.s32.totalorder %s70, %s73
      %p82 = scmp.eq.s32.totalorder %s23, 3
      %p83 = por %p81, %p82
      %p84 = scmp.ne.s32.totalorder %s73, %s74
      %p85 = scmp.eq.s32.totalorder %s23, 0
      %p86 = por %p84, %p85
      %p87 = scmp.ne.s32.totalorder %s73, %s74
      %p88 = scmp.eq.s32.totalorder %s24, 3
      %p89 = por %p87, %p88
      %p91 = scmp.ne.s32.totalorder %s74, %s90
      %p92 = scmp.eq.s32.totalorder %s24, 0
      %p93 = por %p91, %p92
      %s94 = ssub.s32 %s25, %s37
      %s95 = ssub.s32 %s26, %s33
      %s96 = sor.u32 %s94, %s95
      %p97 = scmp.eq.s32.totalorder %s96, 0
      %s99 = sadd.s32 %s98, 1
      %s100 = scalar_select %p97, %s98, %s99
      %p103 = pneg %p97
      %p104 = scmp.eq.s32.totalorder %s18, 3
      %p105 = por %p103, %p104
      %p106 = scmp.ne.s32.totalorder %s98, %s101
      %p107 = scmp.eq.s32.totalorder %s18, 0
      %p108 = por %p106, %p107
      %p109 = scmp.ne.s32.totalorder %s98, %s101
      %p110 = scmp.eq.s32.totalorder %s23, 3
      %p111 = por %p109, %p110
      %p112 = scmp.ne.s32.totalorder %s101, %s102
      %p113 = scmp.eq.s32.totalorder %s23, 0
      %p114 = por %p112, %p113
      %p115 = scmp.ne.s32.totalorder %s101, %s102
      %p116 = scmp.eq.s32.totalorder %s24, 3
      %p117 = por %p115, %p116
      %p119 = scmp.ne.s32.totalorder %s102, %s118
      %p120 = scmp.eq.s32.totalorder %s24, 0
      %p121 = por %p119, %p120
      %s122 = ssub.s32 %s25, %s37
      %s123 = ssub.s32 %s26, %s33
      %s124 = sor.u32 %s122, %s123
      %p125 = scmp.eq.s32.totalorder %s124, 0
      %s127 = sadd.s32 %s126, 1
      %s128 = scalar_select %p125, %s126, %s127
      %p131 = pneg %p125
      %p132 = scmp.eq.s32.totalorder %s18, 3
      %p133 = por %p131, %p132
      %p134 = scmp.ne.s32.totalorder %s126, %s129
      %p135 = scmp.eq.s32.totalorder %s18, 0
      %p136 = por %p134, %p135
      %p137 = scmp.ne.s32.totalorder %s126, %s129
      %p138 = scmp.eq.s32.totalorder %s23, 3
      %p139 = por %p137, %p138
      %p140 = scmp.ne.s32.totalorder %s129, %s130
      %p141 = scmp.eq.s32.totalorder %s23, 0
      %p142 = por %p140, %p141
      %p143 = scmp.ne.s32.totalorder %s129, %s130
      %p144 = scmp.eq.s32.totalorder %s24, 3
      %p145 = por %p143, %p144
      %p147 = scmp.ne.s32.totalorder %s130, %s146
      %p148 = scmp.eq.s32.totalorder %s24, 0
      %p149 = por %p147, %p148
      %p150 = scmp.le.s32.totalorder 1, %s18
      %p151 = scmp.lt.s32.totalorder %s18, 5
      %p152 = pnand %p150, %p151
      %p153 = pneg %p152
      // Predicated region
      $region9: #{tpu_custom_call.1} parent=5 // pred_check
        _
      $region10: #{tpu_custom_call.1} parent=5 // pred_check_branch
        %155 = sbr.rel (%p152) target = $region12
      $region11: #{tpu_custom_call.1} parent=5 // pred_region
        %s156 = ssub.s32 %s18, 1
      $region12: #{tpu_custom_call.1} parent=5 // pred_fallthru
        _
      %p157 = scmp.lt.s32.totalorder %s18, 4
      // Predicated region
      $region13: #{tpu_custom_call.1} parent=5 // pred_check
        %p158 = pneg %p157
      $region14: #{tpu_custom_call.1} parent=5 // pred_check_branch
        %160 = sbr.rel (%p158) target = $region16
      $region15: #{tpu_custom_call.1} parent=5 // pred_region
        // Predicated region
        $region17: #{tpu_custom_call.1} parent=15 // pred_check
          %p161 = pneg %p52
        $region18: #{tpu_custom_call.1} parent=15 // pred_check_branch
          %163 = sbr.rel (%p161) target = $region20
        $region19: #{tpu_custom_call.1} parent=15 // pred_region
          %s164 = sand.u32 %s42, 1
          %s165 = scalar_lea.sflag [#allocation3], %s164
          %s166 = sand.u32 %s42, 1
          %s167 = smul.addr %s166, 32
          %s168 = scalar_lea.vmem [#allocation2], %s167
          %s170 = ssub.s32 512, 512
          %171 = vsyncadd %s165, %s170
          %s172 = smul.addr %s25, 8
          %s173 = sadd.s32 %s26, %s172
          %s174 = smul.addr %s173, 128
          %s175 = scalar_lea.hbm %s0, %s174
          %s176 = sshll.u32 %s168, 4
          %s177 = int_to_ptr.vmem [resolvable:$true] %s176
          %182 = dma.hbm_to_vmem [thread:$0]  %s175, 512, %s177, %s165, 256, 128, 8
        $region20: #{tpu_custom_call.1} parent=15 // pred_fallthru
          _
        // Predicated region
        $region21: #{tpu_custom_call.1} parent=15 // pred_check
          %p183 = pneg %p80
        $region22: #{tpu_custom_call.1} parent=15 // pred_check_branch
          %185 = sbr.rel (%p183) target = $region24
        $region23: #{tpu_custom_call.1} parent=15 // pred_region
          %s186 = sand.u32 %s18, 1
          %s187 = scalar_lea.sflag [#allocation6], %s186
          %s188 = sand.u32 %s70, 1
          %s189 = smul.addr %s188, 16
          %s190 = scalar_lea.vmem [#allocation5], %s189
          %s192 = ssub.s32 256, 256
          %193 = vsyncadd %s187, %s192
          %s194 = smul.addr %s26, 2
          %s195 = smul.addr %s25, 4
          %s196 = sadd.s32 %s194, %s195
          %s197 = smul.addr %s196, 128
          %s198 = scalar_lea.hbm %s1, %s197
          %s199 = sshll.u32 %s190, 4
          %s200 = int_to_ptr.vmem [resolvable:$true] %s199
          %205 = dma.hbm_to_vmem [thread:$0]  %s198, 256, %s200, %s187, 128, 128, 8
        $region24: #{tpu_custom_call.1} parent=15 // pred_fallthru
          _
        // Predicated region
        $region25: #{tpu_custom_call.1} parent=15 // pred_check
          %p206 = pneg %p108
        $region26: #{tpu_custom_call.1} parent=15 // pred_check_branch
          %208 = sbr.rel (%p206) target = $region28
        $region27: #{tpu_custom_call.1} parent=15 // pred_region
          %s209 = sand.u32 %s18, 1
          %s210 = scalar_lea.sflag [#allocation6], %s209
          %s211 = sand.u32 %s98, 1
          %s212 = smul.addr %s211, 8
          %s213 = scalar_lea.vmem [#allocation7], %s212
          %s215 = ssub.s32 128, 128
          %216 = vsyncadd %s210, %s215
          %s217 = smul.addr %s25, 2
          %s218 = sadd.s32 %s26, %s217
          %s219 = smul.addr %s218, 128
          %s220 = scalar_lea.hbm %s2, %s219
          %s222 = sshll.u32 %s213, 4
          %s223 = int_to_ptr.vmem [resolvable:$true] %s222
          %225 = dma.hbm_to_vmem [thread:$0]  %s220, 128, %s223, %s210
        $region28: #{tpu_custom_call.1} parent=15 // pred_fallthru
          _
      $region16: #{tpu_custom_call.1} parent=5 // pred_fallthru
        _
      %p226 = scmp.le.s32.totalorder 1, %s18
      %p227 = scmp.lt.s32.totalorder %s18, 5
      %p228 = pnand %p226, %p227
      %p229 = pneg %p228
      // Predicated region
      $region29: #{tpu_custom_call.1} parent=5 // pred_check
        _
      $region30: #{tpu_custom_call.1} parent=5 // pred_check_branch
        %231 = sbr.rel (%p228) target = $region32
      $region31: #{tpu_custom_call.1} parent=5 // pred_region
        %s232 = ssub.s32 %s18, 1
        %s233 = sand.u32 %s45, 1
        %s234 = scalar_lea.sflag [#allocation3], %s233
        %s235 = sand.u32 %s45, 1
        %s236 = smul.addr %s235, 32
        %s237 = scalar_lea.vmem [#allocation2], %s236
        // Predicated region
        $region33: #{tpu_custom_call.1} parent=31 // pred_check
          %p238 = pneg %p58
        $region34: #{tpu_custom_call.1} parent=31 // pred_check_branch
          %240 = sbr.rel (%p238) target = $region36
        $region35: #{tpu_custom_call.1} parent=31 // pred_region
          %241 = dma.done %s234, 512
        $region36: #{tpu_custom_call.1} parent=31 // pred_fallthru
          _
        %s242 = sand.u32 %s23, 1
        %s243 = scalar_lea.sflag [#allocation6], %s242
        %s244 = sand.u32 %s73, 1
        %s245 = smul.addr %s244, 16
        %s246 = scalar_lea.vmem [#allocation5], %s245
        // Predicated region
        $region37: #{tpu_custom_call.1} parent=31 // pred_check
          %p247 = pneg %p86
        $region38: #{tpu_custom_call.1} parent=31 // pred_check_branch
          %249 = sbr.rel (%p247) target = $region40
        $region39: #{tpu_custom_call.1} parent=31 // pred_region
          %250 = dma.done %s243, 256
        $region40: #{tpu_custom_call.1} parent=31 // pred_fallthru
          _
        %s251 = sand.u32 %s23, 1
        %s252 = scalar_lea.sflag [#allocation6], %s251
        %s253 = sand.u32 %s101, 1
        %s254 = smul.addr %s253, 8
        %s255 = scalar_lea.vmem [#allocation7], %s254
        // Predicated region
        $region41: #{tpu_custom_call.1} parent=31 // pred_check
          %p256 = pneg %p114
        $region42: #{tpu_custom_call.1} parent=31 // pred_check_branch
          %258 = sbr.rel (%p256) target = $region44
        $region43: #{tpu_custom_call.1} parent=31 // pred_region
          %259 = dma.done %s252, 128
        $region44: #{tpu_custom_call.1} parent=31 // pred_fallthru
          _
        %s260 = sand.u32 %s45, 1
        %s261 = scalar_lea.sflag [#allocation3], %s260
        %s262 = sand.u32 %s45, 1
        %s263 = smul.addr %s262, 32
        %s264 = scalar_lea.vmem [#allocation2], %s263
        %p265 = pneg %p58
        %p266 = pneg %p55
        %s267 = sand.u32 %s23, 1
        %s268 = scalar_lea.sflag [#allocation6], %s267
        %s269 = sand.u32 %s73, 1
        %s270 = smul.addr %s269, 16
        %s271 = scalar_lea.vmem [#allocation5], %s270
        %p272 = pneg %p86
        %p273 = pneg %p83
        %s274 = sand.u32 %s23, 1
        %s275 = scalar_lea.sflag [#allocation6], %s274
        %s276 = sand.u32 %s101, 1
        %s277 = smul.addr %s276, 8
        %s278 = scalar_lea.vmem [#allocation7], %s277
        %p279 = pneg %p114
        %p280 = pneg %p111
        %p281 = pneg %p142
        %p282 = pneg %p139
        %s283 = sand.u32 %s129, 1
        %s284 = scalar_lea.sflag [#allocation4], %s283
        %s285 = sand.u32 %s129, 1
        %s286 = smul.addr %s285, 8
        %s287 = scalar_lea.vmem [#allocation8], %s286
        %v288 = vld [vmem:[%s246] sm:$0xff]
        %v289 = vld [vmem:[%s246 + $0x8] sm:$0xff]
        %vm290 = vcmp.eq.s32.totalorder %v288, 0
        %vm291 = vcmp.eq.s32.totalorder %v289, 0
        %vm292 = vcmp.eq.s32.totalorder %v288, 1
        %vm293 = vcmp.eq.s32.totalorder %v289, 1
        %vm294 = vcmp.eq.s32.totalorder %v288, 2
        %vm295 = vcmp.eq.s32.totalorder %v289, 2
        %vm296 = vcmp.eq.s32.totalorder %v288, 3
        %vm297 = vcmp.eq.s32.totalorder %v289, 3
        %v298 = vsel %vm290, 1, 0
        %v299 = vsel %vm291, 1, 0
        %v300 = vsel %vm292, 1, 0
        %v301 = vsel %vm293, 1, 0
        %v302 = vsel %vm294, 1, 0
        %v303 = vsel %vm295, 1, 0
        %v304 = vsel %vm296, 1, 0
        %v305 = vsel %vm297, 1, 0
        %v306 = vcvt.s32.f32 %v298
        %v307 = vcvt.s32.f32 %v299
        %v308 = vcvt.s32.f32 %v300
        %v309 = vcvt.s32.f32 %v301
        %v310 = vcvt.s32.f32 %v302
        %v311 = vcvt.s32.f32 %v303
        %v312 = vcvt.s32.f32 %v304
        %v313 = vcvt.s32.f32 %v305
        %322 = vrot.lane.b32.xlu0 %v306, 126
        %v323 = vpop.permute.xlu0 %322
        %324 = vrot.lane.b32.xlu0 %v307, 126
        %v325 = vpop.permute.xlu0 %324
        %326 = vrot.lane.b32.xlu0 %v308, 126
        %v327 = vpop.permute.xlu0 %326
        %328 = vrot.lane.b32.xlu0 %v309, 126
        %v329 = vpop.permute.xlu0 %328
        %330 = vrot.lane.b32.xlu0 %v310, 126
        %v331 = vpop.permute.xlu0 %330
        %332 = vrot.lane.b32.xlu0 %v311, 126
        %v333 = vpop.permute.xlu0 %332
        %334 = vrot.lane.b32.xlu0 %v312, 126
        %v335 = vpop.permute.xlu0 %334
        %336 = vrot.lane.b32.xlu0 %v313, 126
        %v337 = vpop.permute.xlu0 %336
        %v346 = vmax.f32 %v306, %v323
        %v347 = vmax.f32 %v307, %v325
        %v348 = vmax.f32 %v308, %v327
        %v349 = vmax.f32 %v309, %v329
        %v350 = vmax.f32 %v310, %v331
        %v351 = vmax.f32 %v311, %v333
        %v352 = vmax.f32 %v312, %v335
        %v353 = vmax.f32 %v313, %v337
        %362 = vrot.lane.b32.xlu0 %v346, 1
        %v363 = vpop.permute.xlu0 %362
        %364 = vrot.lane.b32.xlu0 %v347, 1
        %v365 = vpop.permute.xlu0 %364
        %366 = vrot.lane.b32.xlu0 %v348, 1
        %v367 = vpop.permute.xlu0 %366
        %368 = vrot.lane.b32.xlu0 %v349, 1
        %v369 = vpop.permute.xlu0 %368
        %370 = vrot.lane.b32.xlu0 %v350, 1
        %v371 = vpop.permute.xlu0 %370
        %372 = vrot.lane.b32.xlu0 %v351, 1
        %v373 = vpop.permute.xlu0 %372
        %374 = vrot.lane.b32.xlu0 %v352, 1
        %v375 = vpop.permute.xlu0 %374
        %376 = vrot.lane.b32.xlu0 %v353, 1
        %v377 = vpop.permute.xlu0 %376
        %v386 = vmax.f32 %v306, %v363
        %v387 = vmax.f32 %v307, %v365
        %v388 = vmax.f32 %v308, %v367
        %v389 = vmax.f32 %v309, %v369
        %v390 = vmax.f32 %v310, %v371
        %v391 = vmax.f32 %v311, %v373
        %v392 = vmax.f32 %v312, %v375
        %v393 = vmax.f32 %v313, %v377
        %394 = vrot.lane.b32.xlu0 %v306, 124
        %v395 = vpop.permute.xlu0 %394
        %396 = vrot.lane.b32.xlu0 %v307, 124
        %v397 = vpop.permute.xlu0 %396
        %398 = vrot.lane.b32.xlu0 %v308, 124
        %v399 = vpop.permute.xlu0 %398
        %400 = vrot.lane.b32.xlu0 %v309, 124
        %v401 = vpop.permute.xlu0 %400
        %402 = vrot.lane.b32.xlu0 %v310, 124
        %v403 = vpop.permute.xlu0 %402
        %404 = vrot.lane.b32.xlu0 %v311, 124
        %v405 = vpop.permute.xlu0 %404
        %406 = vrot.lane.b32.xlu0 %v312, 124
        %v407 = vpop.permute.xlu0 %406
        %408 = vrot.lane.b32.xlu0 %v313, 124
        %v409 = vpop.permute.xlu0 %408
        %v418 = vmax.f32 %v306, %v395
        %v419 = vmax.f32 %v307, %v397
        %v420 = vmax.f32 %v308, %v399
        %v421 = vmax.f32 %v309, %v401
        %v422 = vmax.f32 %v310, %v403
        %v423 = vmax.f32 %v311, %v405
        %v424 = vmax.f32 %v312, %v407
        %v425 = vmax.f32 %v313, %v409
        %434 = vrot.lane.b32.xlu0 %v418, 2
        %v435 = vpop.permute.xlu0 %434
        %436 = vrot.lane.b32.xlu0 %v419, 2
        %v437 = vpop.permute.xlu0 %436
        %438 = vrot.lane.b32.xlu0 %v420, 2
        %v439 = vpop.permute.xlu0 %438
        %440 = vrot.lane.b32.xlu0 %v421, 2
        %v441 = vpop.permute.xlu0 %440
        %442 = vrot.lane.b32.xlu0 %v422, 2
        %v443 = vpop.permute.xlu0 %442
        %444 = vrot.lane.b32.xlu0 %v423, 2
        %v445 = vpop.permute.xlu0 %444
        %446 = vrot.lane.b32.xlu0 %v424, 2
        %v447 = vpop.permute.xlu0 %446
        %448 = vrot.lane.b32.xlu0 %v425, 2
        %v449 = vpop.permute.xlu0 %448
        %v458 = vmax.f32 %v386, %v435
        %v459 = vmax.f32 %v387, %v437
        %v460 = vmax.f32 %v388, %v439
        %v461 = vmax.f32 %v389, %v441
        %v462 = vmax.f32 %v390, %v443
        %v463 = vmax.f32 %v391, %v445
        %v464 = vmax.f32 %v392, %v447
        %v465 = vmax.f32 %v393, %v449
        %vm474 = vcmask 1046528
        %v475 = vrot.slane %v458, 1
        %v476 = vrot.slane %v459, 1
        %v477 = vsel %vm474, %v475, %v476
        %v478 = vrot.slane %v460, 1
        %v479 = vrot.slane %v461, 1
        %v480 = vsel %vm474, %v478, %v479
        %v481 = vrot.slane %v462, 1
        %v482 = vrot.slane %v463, 1
        %v483 = vsel %vm474, %v481, %v482
        %v484 = vrot.slane %v464, 1
        %v485 = vrot.slane %v465, 1
        %v486 = vsel %vm474, %v484, %v485
        %v491 = vmax.f32 %v306, %v477
        %v492 = vmax.f32 %v308, %v480
        %v493 = vmax.f32 %v310, %v483
        %v494 = vmax.f32 %v312, %v486
        %vm495 = vcmask 1045504
        %v496 = vrot.slane %v458, 2
        %v497 = vrot.slane %v459, 2
        %v498 = vsel %vm495, %v496, %v497
        %v499 = vrot.slane %v460, 2
        %v500 = vrot.slane %v461, 2
        %v501 = vsel %vm495, %v499, %v500
        %v502 = vrot.slane %v462, 2
        %v503 = vrot.slane %v463, 2
        %v504 = vsel %vm495, %v502, %v503
        %v505 = vrot.slane %v464, 2
        %v506 = vrot.slane %v465, 2
        %v507 = vsel %vm495, %v505, %v506
        %v512 = vmax.f32 %v491, %v498
        %v513 = vmax.f32 %v492, %v501
        %v514 = vmax.f32 %v493, %v504
        %v515 = vmax.f32 %v494, %v507
        %vm516 = vcmask 1044480
        %v517 = vrot.slane %v458, 3
        %v518 = vrot.slane %v459, 3
        %v519 = vsel %vm516, %v517, %v518
        %v520 = vrot.slane %v460, 3
        %v521 = vrot.slane %v461, 3
        %v522 = vsel %vm516, %v520, %v521
        %v523 = vrot.slane %v462, 3
        %v524 = vrot.slane %v463, 3
        %v525 = vsel %vm516, %v523, %v524
        %v526 = vrot.slane %v464, 3
        %v527 = vrot.slane %v465, 3
        %v528 = vsel %vm516, %v526, %v527
        %v533 = vmax.f32 %v512, %v519
        %v534 = vmax.f32 %v513, %v522
        %v535 = vmax.f32 %v514, %v525
        %v536 = vmax.f32 %v515, %v528
        %vm537 = vcmask 1043456
        %v538 = vrot.slane %v306, 4
        %v539 = vrot.slane %v307, 4
        %v540 = vsel %vm537, %v538, %v539
        %v541 = vrot.slane %v308, 4
        %v542 = vrot.slane %v309, 4
        %v543 = vsel %vm537, %v541, %v542
        %v544 = vrot.slane %v310, 4
        %v545 = vrot.slane %v311, 4
        %v546 = vsel %vm537, %v544, %v545
        %v547 = vrot.slane %v312, 4
        %v548 = vrot.slane %v313, 4
        %v549 = vsel %vm537, %v547, %v548
        %v554 = vmax.f32 %v533, %v540
        %v555 = vmax.f32 %v534, %v543
        %v556 = vmax.f32 %v535, %v546
        %v557 = vmax.f32 %v536, %v549
        %v558 = vld [vmem:[%s237] sm:$0xff]
        %v559 = vld [vmem:[%s237 + $0x8] sm:$0xff]
        %v560 = vld [vmem:[%s237 + $0x10] sm:$0xff]
        %v561 = vld [vmem:[%s237 + $0x18] sm:$0xff]
        %vm562 = vcmask 130048
        %v563 = vsel %vm562, %v558, -inf
        %v564 = vsel %vm562, %v559, -inf
        %v565 = vsel %vm562, %v560, -inf
        %v566 = vsel %vm562, %v561, -inf
        %v567 = vmax.f32 %v563, %v564
        %v568 = vmax.f32 %v565, %v566
        %v569 = vmax.f32 %v567, %v568
        %v570 = vsub.f32 %v558, %v569
        %v571 = vsub.f32 %v559, %v569
        %v572 = vsub.f32 %v560, %v569
        %v573 = vsub.f32 %v561, %v569
        %v574 = vmul.f32 %v570, 1.442695
        %v575 = vpow.pop %v574
        %v576 = vmul.f32 %v571, 1.442695
        %v577 = vpow.pop %v576
        %v578 = vmul.f32 %v572, 1.442695
        %v579 = vpow.pop %v578
        %v580 = vmul.f32 %v573, 1.442695
        %v581 = vpow.pop %v580
        %v582 = vsel %vm562, %v575, 0.0
        %v583 = vsel %vm562, %v577, 0.0
        %v584 = vadd.f32 %v582, %v583
        %v585 = vsel %vm562, %v579, 0.0
        %v586 = vadd.f32 %v584, %v585
        %v587 = vsel %vm562, %v581, 0.0
        %v588 = vadd.f32 %v586, %v587
        %v589 = vlog2.pop %v588
        %v590 = vmul.f32 %v589, 0.6931472
        %v591 = vsub.f32 %v570, %v590
        %v592 = vsub.f32 %v571, %v590
        %v593 = vsub.f32 %v572, %v590
        %v594 = vsub.f32 %v573, %v590
        %599 = vrot.lane.b32.xlu0 %v591, 2
        %v600 = vpop.permute.xlu0 %599
        %601 = vrot.lane.b32.xlu0 %v592, 2
        %v602 = vpop.permute.xlu0 %601
        %603 = vrot.lane.b32.xlu0 %v593, 2
        %v604 = vpop.permute.xlu0 %603
        %605 = vrot.lane.b32.xlu0 %v594, 2
        %v606 = vpop.permute.xlu0 %605
        %v611 = vmul.f32 %v554, %v600
        %v612 = vmul.f32 %v555, %v602
        %v613 = vmul.f32 %v556, %v604
        %v614 = vmul.f32 %v557, %v606
        %vm615 = vcmask 146448
        %v616 = vsel %vm615, %v611, 0.0
        %v617 = vsel %vm615, %v612, 0.0
        %v618 = vadd.f32 %v616, %v617
        %v619 = vsel %vm615, %v613, 0.0
        %v620 = vadd.f32 %v618, %v619
        %v621 = vsel %vm615, %v614, 0.0
        %v622 = vadd.f32 %v620, %v621
        %v623 = vrot.slane %v591, 6
        %v624 = vrot.slane %v592, 6
        %v625 = vrot.slane %v593, 6
        %v626 = vrot.slane %v594, 6
        %627 = vrot.lane.b32.xlu0 %v623, 2
        %v628 = vpop.permute.xlu0 %627
        %629 = vrot.lane.b32.xlu0 %v624, 2
        %v630 = vpop.permute.xlu0 %629
        %631 = vrot.lane.b32.xlu0 %v625, 2
        %v632 = vpop.permute.xlu0 %631
        %633 = vrot.lane.b32.xlu0 %v626, 2
        %v634 = vpop.permute.xlu0 %633
        %v639 = vmul.f32 %v306, %v628
        %v640 = vmul.f32 %v307, %v628
        %v641 = vmul.f32 %v308, %v630
        %v642 = vmul.f32 %v309, %v630
        %v643 = vmul.f32 %v310, %v632
        %v644 = vmul.f32 %v311, %v632
        %v645 = vmul.f32 %v312, %v634
        %v646 = vmul.f32 %v313, %v634
        %vm647 = vcmask 146450
        %v648 = vsel %vm647, %v639, 0.0
        %v649 = vsel %vm647, %v641, 0.0
        %v650 = vadd.f32 %v648, %v649
        %v651 = vsel %vm647, %v643, 0.0
        %v652 = vadd.f32 %v650, %v651
        %v653 = vsel %vm647, %v645, 0.0
        %v654 = vadd.f32 %v652, %v653
        %vm655 = vcmask 140304
        %v656 = vsel %vm655, %v640, 0.0
        %v657 = vsel %vm655, %v642, 0.0
        %v658 = vadd.f32 %v656, %v657
        %v659 = vsel %vm655, %v644, 0.0
        %v660 = vadd.f32 %v658, %v659
        %v661 = vsel %vm655, %v646, 0.0
        %v662 = vadd.f32 %v660, %v661
        %v663 = vsel %vm615, %v554, 0.0
        %v664 = vsel %vm615, %v555, 0.0
        %v665 = vadd.f32 %v663, %v664
        %v666 = vsel %vm615, %v556, 0.0
        %v667 = vadd.f32 %v665, %v666
        %v668 = vsel %vm615, %v557, 0.0
        %v669 = vadd.f32 %v667, %v668
        %v670 = vld [vmem:[%s255] sm:$0xff]
        %vm671 = vcmp.ne.s32.totalorder %v670, 255
        %v672 = vsel %vm671, 1, 0
        %v673 = vcvt.s32.f32 %v672
        %v674 = vmul.f32 %v622, 0.1
        %v675 = vmul.f32 %v654, 0.8
        %v676 = vmul.f32 %v662, 0.8
        %v679 = vrot.slane %v675, 2
        %v680 = vrot.slane %v676, 2
        %v681 = vsel %vm495, %v679, %v680
        %v683 = vadd.f32 %v674, %v681
        %v684 = vmul.f32 %v669, -0.23025851
        %686 = vrot.lane.b32.xlu0 %v673, 2
        %v687 = vpop.permute.xlu0 %686
        %v689 = vmul.f32 %v683, %v687
        %v690 = vsub.f32 %v684, %v689
        %692 = vrot.lane.b32.xlu0 %v690, 126
        %v693 = vpop.permute.xlu0 %692
        %v695 = vsel %vm562, %v693, 0.0
        %696 = vadd.xlane.f32.xlu0 %v695
        %v697 = vpop.xlane.xlu0 %696
        %v698 = vrot.slane %v697, 4
        %v699 = vadd.f32 %v697, %v698
        %v700 = vrot.slane %v699, 2
        %v701 = vadd.f32 %v699, %v700
        %v702 = vrot.slane %v701, 1
        %v703 = vadd.f32 %v701, %v702
        %s704 = vtos %v703
        %v705 = vstv %s704
        %706 = vst [vmem:[%s287] sm:$0xff] %v705
        %s707 = sand.u32 %s129, 1
        %s708 = scalar_lea.sflag [#allocation4], %s707
        %s709 = sand.u32 %s129, 1
        %s710 = smul.addr %s709, 8
        %s711 = scalar_lea.vmem [#allocation8], %s710
        // Predicated region
        $region45: #{tpu_custom_call.1} parent=31 // pred_check
          %p712 = pneg %p139
        $region46: #{tpu_custom_call.1} parent=31 // pred_check_branch
          %714 = sbr.rel (%p712) target = $region48
        $region47: #{tpu_custom_call.1} parent=31 // pred_region
          %s716 = ssub.s32 128, 128
          %717 = vsyncadd %s708, %s716
          %s718 = smul.addr %s27, 2
          %s719 = sadd.s32 %s28, %s718
          %s720 = smul.addr %s719, 128
          %s721 = scalar_lea.hbm %s3, %s720
          %s723 = sshll.u32 %s711, 4
          %s724 = int_to_ptr.vmem [resolvable:$true] %s723
          %726 = dma.vmem_to_hbm [thread:$0]  %s724, 128, %s721, %s708
        $region48: #{tpu_custom_call.1} parent=31 // pred_fallthru
          _
      $region32: #{tpu_custom_call.1} parent=5 // pred_fallthru
        _
      %p727 = scmp.le.s32.totalorder 2, %s18
      // Predicated region
      $region49: #{tpu_custom_call.1} parent=5 // pred_check
        %p728 = pneg %p727
      $region50: #{tpu_custom_call.1} parent=5 // pred_check_branch
        %730 = sbr.rel (%p728) target = $region52
      $region51: #{tpu_custom_call.1} parent=5 // pred_region
        %s731 = ssub.s32 %s18, 2
        // Predicated region
        $region53: #{tpu_custom_call.1} parent=51 // pred_check
          %p732 = pneg %p145
        $region54: #{tpu_custom_call.1} parent=51 // pred_check_branch
          %734 = sbr.rel (%p732) target = $region56
        $region55: #{tpu_custom_call.1} parent=51 // pred_region
          %s735 = sand.u32 %s130, 1
          %s736 = scalar_lea.sflag [#allocation4], %s735
          %s737 = sand.u32 %s130, 1
          %s738 = smul.addr %s737, 8
          %s739 = scalar_lea.vmem [#allocation8], %s738
          %740 = dma.done %s736, 128
        $region56: #{tpu_custom_call.1} parent=51 // pred_fallthru
          _
      $region52: #{tpu_custom_call.1} parent=5 // pred_fallthru
        _
    $region6: #{tpu_custom_call.1} parent=1 // loop_footer
      %s22 = sadd.s32 1, %s18
    $region7: #{tpu_custom_call.1} parent=1 // loop_footer_branch
      %17 = sbr.rel target = $region3
    $region8: #{tpu_custom_call.1} parent=1 // loop_exit
      _
    %741 = vsyncpa [#allocation3], 1
    %s742 = scalar_lea.sflag [#allocation3], 1
    %743 = vsyncpa %s742, 1
    %744 = vsyncpa [#allocation6], 1
    %s745 = scalar_lea.sflag [#allocation6], 1
    %746 = vsyncpa %s745, 1
    %747 = vsyncpa [#allocation4], 1
    %s748 = scalar_lea.sflag [#allocation4], 1
    %749 = vsyncpa %s748, 1

</llo_original>
